<compile_context>
chip_gen: v6e
topology: v6e:2x2x1
jax: 0.10.0
libtpu: 0.0.40
codegen_flags: <defaults>
</compile_context>

<pallas_src>
import functools

import jax
import jax.numpy as jnp
from jax.experimental import pallas as pl
from jax.experimental.pallas import tpu as pltpu

_LANES = 128


# ---------------------------------------------------------------------------
# Streaming kernel: grid (B, T/TT, V/TV), vocab innermost reduction axis.
# ---------------------------------------------------------------------------
def _pg_loss_stream_kernel(reward_ref, lp_ref, lab_ref, out_ref, acc_ref, *,
                           seq_len, ignore_index):
    b = pl.program_id(0)
    t = pl.program_id(1)
    v = pl.program_id(2)

    @pl.when(v == 0)
    def _():
        acc_ref[...] = jnp.zeros(acc_ref.shape, acc_ref.dtype)

    lp = lp_ref[...].astype(jnp.float32)      # one layout for the select
    lab = lab_ref[...]                        # (TT, 1) int32
    TT, TV = lp.shape

    # Fold row-validity + ignore_index into the label ((TT,1)-shaped work) and
    # shift the label by the tile offset so the compare uses a tile-local
    # iota: no full-(TT,TV) integer add or extra mask AND on the VPU chain.
    row_ids = t * TT + jax.lax.broadcasted_iota(jnp.int32, (TT, 1), 0)
    valid = row_ids < seq_len
    if ignore_index is not None:
        valid = jnp.logical_and(valid, lab != ignore_index)
    lab_local = jnp.where(valid, lab, -1) - v * TV            # (TT, 1)

    hit = jax.lax.broadcasted_iota(jnp.int32, (TT, TV), 1) == lab_local
    contrib = jnp.where(hit, lp, 0.0)                          # (TT, TV) f32

    # Per-sublane partial sums: pure vreg adds; the sublane+lane reduce is
    # deferred to the finalize step (keeps XLU off the hot loop).
    acc_rows = acc_ref.shape[0]
    if TT == acc_rows:
        acc_ref[...] += contrib
    else:
        part = contrib[0:acc_rows, :]
        for i in range(1, TT // acc_rows):
            part = part + contrib[i * acc_rows:(i + 1) * acc_rows, :]
        acc_ref[...] += part

    # Finalize once per (b, t-block): cross-lane reduce + scaled store.
    @pl.when(v == pl.num_programs(2) - 1)
    def _():
        total = jnp.sum(acc_ref[...])
        out_ref[...] = jnp.full(out_ref.shape, -reward_ref[b] * total,
                                dtype=out_ref.dtype)


# ---------------------------------------------------------------------------
# Gather kernel: labels in SMEM drive manual 128-lane DMAs out of HBM.
# ---------------------------------------------------------------------------
def _pg_loss_gather_kernel(reward_ref, labels_ref, lab_ref, lp_hbm, out_ref,
                           buf_ref, sem_ref, *, seq_len, vocab, ignore_index,
                           rows):
    b = pl.program_id(0)
    t = pl.program_id(1)

    def row_copy(r):
        row = jnp.minimum(t * rows + r, seq_len - 1)
        lab = labels_ref[b * seq_len + row]
        lab = jnp.clip(lab, 0, vocab - 1)
        col = jnp.minimum((lab // _LANES) * _LANES, vocab - _LANES)
        return pltpu.make_async_copy(
            lp_hbm.at[b, pl.ds(row, 1), pl.ds(col, _LANES)],
            buf_ref.at[pl.ds(r, 1), :],
            sem_ref.at[0])

    def _issue(r, carry):
        row_copy(r).start()
        return carry
    jax.lax.fori_loop(0, rows, _issue, 0)

    def _wait(r, carry):
        row_copy(r).wait()
        return carry
    jax.lax.fori_loop(0, rows, _wait, 0)

    lab = lab_ref[...]                          # (rows, 1) int32
    row_ids = t * rows + jax.lax.broadcasted_iota(jnp.int32, (rows, 1), 0)
    valid = row_ids < seq_len
    if ignore_index is not None:
        valid = jnp.logical_and(valid, lab != ignore_index)
    lab_c = jnp.clip(lab, 0, vocab - 1)
    col = jnp.minimum((lab_c // _LANES) * _LANES, vocab - _LANES)
    loc = jnp.where(valid, lab_c - col, -1)     # (rows, 1) local lane id

    hit = jax.lax.broadcasted_iota(jnp.int32, (rows, _LANES), 1) == loc
    vals = buf_ref[...].astype(jnp.float32)
    total = jnp.sum(jnp.where(hit, vals, 0.0))
    out_ref[...] = jnp.full(out_ref.shape, -reward_ref[b] * total,
                            dtype=out_ref.dtype)


# ---------------------------------------------------------------------------
# Wrappers.
# ---------------------------------------------------------------------------
def _choose_block(dim, target, align):
    """Largest `align`-multiple <= target (full dim if dim <= align)."""
    if dim <= align:
        return dim
    target = max(align, min(target, dim))
    return (target // align) * align


def _vmem_capacity_bytes():
    try:
        return int(pltpu.get_tpu_info().vmem_capacity_bytes)
    except Exception:
        return 64 << 20       # conservative (v7x per-TC VMEM)


def _pg_loss_stream(logprobs, label3, reward1, *, ignore_index, block_t,
                    block_v):
    B, T, V = logprobs.shape
    itemsize = jnp.dtype(logprobs.dtype).itemsize
    sub_align = 8 * max(1, 4 // itemsize)       # 8 f32, 16 bf16, 32 int8

    vmem_cap = _vmem_capacity_bytes()
    tv_default = 8192 if vmem_cap >= (96 << 20) else 4096   # v7x-safe default

    TT = _choose_block(T, 256 if block_t is None else block_t, sub_align)
    TV = _choose_block(V, tv_default if block_v is None else block_v, 128)
    acc_rows = 8 if TT % 8 == 0 else TT

    nt = pl.cdiv(T, TT)
    grid = (B, nt, pl.cdiv(V, TV))

    kernel = functools.partial(_pg_loss_stream_kernel, seq_len=T,
                               ignore_index=ignore_index)

    # Explicit VMEM budget: double-buffered logprob tiles dominate.
    vmem_need = (2 * TT * TV * itemsize + 2 * TT * 4 + acc_rows * TV * 4
                 + (64 << 10))
    vmem_limit = int(min(max(2 * vmem_need + (8 << 20), 32 << 20),
                         110 << 20, int(vmem_cap * 0.85)))

    cost = pl.CostEstimate(
        flops=4 * B * T * V, transcendentals=0,
        bytes_accessed=int(B * T * V * itemsize + B * T * 4 + B * 4))

    return pl.pallas_call(
        kernel,
        out_shape=jax.ShapeDtypeStruct((B * nt, 1, 1), jnp.float32),
        grid_spec=pltpu.PrefetchScalarGridSpec(
            num_scalar_prefetch=1,              # reward -> SMEM once
            grid=grid,
            in_specs=[
                pl.BlockSpec((None, TT, TV), lambda b, t, v, r: (b, t, v)),
                pl.BlockSpec((None, TT, 1), lambda b, t, v, r: (b, t, 0)),
            ],
            out_specs=pl.BlockSpec((None, 1, 1),
                                   lambda b, t, v, r: (b * nt + t, 0, 0)),
            scratch_shapes=[pltpu.VMEM((acc_rows, TV), jnp.float32)],
        ),
        compiler_params=pltpu.CompilerParams(
            dimension_semantics=("parallel", "parallel", "arbitrary"),
            vmem_limit_bytes=vmem_limit),
        cost_estimate=cost,
    )(reward1, logprobs, label3)


def _pg_loss_gather(logprobs, label3, reward1, *, ignore_index, block_t):
    B, T, V = logprobs.shape
    itemsize = jnp.dtype(logprobs.dtype).itemsize

    TT = _choose_block(T, 128 if block_t is None else block_t, 8)
    nt = pl.cdiv(T, TT)
    labels_flat = label3.reshape(B * T).astype(jnp.int32)

    kernel = functools.partial(_pg_loss_gather_kernel, seq_len=T, vocab=V,
                               ignore_index=ignore_index, rows=TT)

    cost = pl.CostEstimate(
        flops=4 * B * T * _LANES, transcendentals=0,
        bytes_accessed=int(B * T * (_LANES * itemsize + 8) + B * 4))

    return pl.pallas_call(
        kernel,
        out_shape=jax.ShapeDtypeStruct((B * nt, 1, 1), jnp.float32),
        grid_spec=pltpu.PrefetchScalarGridSpec(
            num_scalar_prefetch=2,              # reward + flat labels -> SMEM
            grid=(B, nt),
            in_specs=[
                pl.BlockSpec((None, TT, 1), lambda b, t, rew, labs: (b, t, 0)),
                pl.BlockSpec(memory_space=pl.ANY),   # logprobs stay in HBM
            ],
            out_specs=pl.BlockSpec((None, 1, 1),
                                   lambda b, t, rew, labs: (b * nt + t, 0, 0)),
            scratch_shapes=[
                pltpu.VMEM((TT, _LANES), logprobs.dtype),
                pltpu.SemaphoreType.DMA((1,)),
            ],
        ),
        compiler_params=pltpu.CompilerParams(
            dimension_semantics=("parallel", "arbitrary")),
        cost_estimate=cost,
    )(reward1, labels_flat, label3, logprobs)


def pg_loss(logprobs, label, reward, *, ignore_index=None, size_average=False,
            block_t=None, block_v=None, use_gather=None):
    """logprobs: (B, T, V) float, label: (B, T) int, reward: (B,) float."""
    B, T, V = logprobs.shape
    itemsize = jnp.dtype(logprobs.dtype).itemsize

    label3 = label.astype(jnp.int32).reshape(B, T, 1)
    reward1 = reward.astype(jnp.float32).reshape(B)

    if use_gather is None:
        # Label-driven gather pays off once V is large; auto-enable for 32-bit
        # logprobs (sub-32-bit DMA rows work but keep them opt-in for now).
        use_gather = (V >= 2048) and (itemsize == 4)
    use_gather = bool(use_gather) and (V >= _LANES)

    if use_gather:
        out = _pg_loss_gather(logprobs, label3, reward1,
                              ignore_index=ignore_index, block_t=block_t)
    else:
        out = _pg_loss_stream(logprobs, label3, reward1,
                              ignore_index=ignore_index, block_t=block_t,
                              block_v=block_v)

    loss = jnp.sum(out)                 # sum the per-(b, t-block) partials
    if size_average:
        loss = loss / B
    return loss


def pg_loss_ref(logprobs, label, reward, ignore_index=None,
                size_average=False):
    lp = logprobs
    if ignore_index is not None:
        lp = lp.at[:, :, ignore_index].set(0.0)
    gathered = jnp.take_along_axis(
        lp, label[..., None].astype(jnp.int32), axis=-1)[..., 0]   # (B, T)
    loss = jnp.sum(-reward[:, None] * gathered)
    if size_average:
        loss = loss / logprobs.shape[0]
    return loss


if __name__ == "__main__":
    key = jax.random.PRNGKey(0)

    def run_case(B, T, V, *, ignore_index=None, size_average=False,
                 block_t=None, block_v=None, dtype=jnp.float32,
                 use_gather=None, seed_offset=0):
        k1, k2, k3 = jax.random.split(jax.random.fold_in(key, seed_offset), 3)
        logits = jax.random.normal(k1, (B, T, V), dtype=jnp.float32)
        logprobs = jax.nn.log_softmax(logits, axis=-1).astype(dtype)
        label = jax.random.randint(k2, (B, T), 0, V, dtype=jnp.int32)
        reward = jax.random.uniform(k3, (B,), dtype=jnp.float32)

        loss = pg_loss(logprobs, label, reward, ignore_index=ignore_index,
                       size_average=size_average, block_t=block_t,
                       block_v=block_v, use_gather=use_gather)
        loss = jax.block_until_ready(loss)
        ref = pg_loss_ref(logprobs.astype(jnp.float32), label, reward,
                          ignore_index=ignore_index,
                          size_average=size_average)
        assert jnp.allclose(loss, ref, rtol=1e-4, atol=1e-3), (
            (B, T, V, str(dtype)), loss, ref)

    # Streaming path, single tile.
    run_case(2, 8, 128)
    # Streaming, multi-tile grid over T and V, ignore_index handled in-kernel.
    run_case(3, 24, 384, ignore_index=5, block_t=8, block_v=128, seed_offset=1)
    # Streaming, non-dividing tiles (edge-block row/column masking) + /B.
    run_case(2, 20, 320, block_t=8, block_v=128, size_average=True,
             seed_offset=2)
    # Streaming, bf16 logprobs (16-aligned T tiles, f32 accumulation).
    run_case(2, 24, 256, dtype=jnp.bfloat16, seed_offset=3)
    # Label-driven gather path (manual DMA of 128-lane slices from HBM).
    run_case(2, 16, 512, use_gather=True, seed_offset=4)
    # Gather path with edge rows + ignore_index + non-128-aligned label slice.
    run_case(2, 20, 640, ignore_index=3, use_gather=True, seed_offset=5)

    print("KERNEL_OK")
</pallas_src>

<mosaic_0001>
module attributes {stable_mosaic.version = 11 : i64} {
  func.func @_pg_loss_stream_kernel(%arg0: i32, %arg1: i32, %arg2: i32, %arg3: memref<2xf32, #tpu.memory_space<smem>>, %arg4: memref<1x8x128xf32, #tpu.memory_space<vmem>>, %arg5: memref<1x8x1xi32, #tpu.memory_space<vmem>>, %arg6: memref<1x1x1xf32, #tpu.memory_space<vmem>>, %arg7: memref<8x128xf32, #tpu.memory_space<vmem>>) attributes {dimension_semantics = [#tpu.dimension_semantics<parallel>, #tpu.dimension_semantics<parallel>, #tpu.dimension_semantics<arbitrary>], iteration_bounds = array<i64: 2, 1, 1>, scalar_prefetch = 1 : i64, scratch_operands = 1 : i64, tpu.core_type = #tpu.core_type<tc>, window_params = [{transform_indices = @transform_0, window_bounds = array<i64: 1, 8, 128>}, {transform_indices = @transform_1, window_bounds = array<i64: 1, 8, 1>}, {transform_indices = @transform_2, window_bounds = array<i64: 1, 1, 1>}]} {
    %c0_i32 = arith.constant 0 : i32
    %0 = arith.cmpi eq, %arg2, %c0_i32 : i32
    %1 = arith.extui %0 : i1 to i32
    %c0_i32_0 = arith.constant 0 : i32
    %2 = arith.cmpi ne, %1, %c0_i32_0 : i32
    scf.if %2 {
      %cst_13 = arith.constant 0.000000e+00 : f32
      %29 = vector.broadcast %cst_13 : f32 to vector<8x128xf32>
      %c0_14 = arith.constant 0 : index
      %c0_15 = arith.constant 0 : index
      %30 = vector.load %arg7[%c0_14, %c0_15] : memref<8x128xf32, #tpu.memory_space<vmem>>, vector<8x128xf32>
      tpu.vector_store %arg7[%c0_14, %c0_15], %29 {strides = array<i32>} : memref<8x128xf32, #tpu.memory_space<vmem>>, vector<8x128xf32>,
    } else {
    }
    %c0 = arith.constant 0 : index
    %c0_1 = arith.constant 0 : index
    %c0_2 = arith.constant 0 : index
    %3 = vector.load %arg4[%c0, %c0_1, %c0_2] : memref<1x8x128xf32, #tpu.memory_space<vmem>>, vector<1x8x128xf32>
    %4 = vector.shape_cast %3 : vector<1x8x128xf32> to vector<8x128xf32>
    %c0_3 = arith.constant 0 : index
    %c0_4 = arith.constant 0 : index
    %c0_5 = arith.constant 0 : index
    %5 = vector.load %arg5[%c0_3, %c0_4, %c0_5] : memref<1x8x1xi32, #tpu.memory_space<vmem>>, vector<1x8x1xi32>
    %6 = vector.shape_cast %5 : vector<1x8x1xi32> to vector<8x1xi32>
    %c8_i32 = arith.constant 8 : i32
    %7 = arith.muli %arg1, %c8_i32 : i32
    %8 = tpu.iota {dimensions = array<i32: 0>} : vector<8x1xi32>
    %9 = vector.broadcast %7 : i32 to vector<8x1xi32>
    %10 = arith.addi %9, %8 : vector<8x1xi32>
    %c8_i32_6 = arith.constant 8 : i32
    %11 = vector.broadcast %c8_i32_6 : i32 to vector<8x1xi32>
    %12 = arith.cmpi slt, %10, %11 : vector<8x1xi32>
    %c-1_i32 = arith.constant -1 : i32
    %13 = vector.broadcast %c-1_i32 : i32 to vector<8x1xi32>
    %14 = arith.select %12, %6, %13 : vector<8x1xi1>, vector<8x1xi32>
    %c128_i32 = arith.constant 128 : i32
    %15 = arith.muli %arg2, %c128_i32 : i32
    %16 = vector.broadcast %15 : i32 to vector<8x1xi32>
    %17 = arith.subi %14, %16 : vector<8x1xi32>
    %18 = tpu.iota {dimensions = array<i32: 1>} : vector<8x128xi32>
    %19 = vector.broadcast %17 : vector<8x1xi32> to vector<8x128xi32>
    %20 = arith.cmpi eq, %18, %19 : vector<8x128xi32>
    %cst = arith.constant 0.000000e+00 : f32
    %21 = vector.broadcast %cst : f32 to vector<8x128xf32>
    %22 = arith.select %20, %4, %21 : vector<8x128xi1>, vector<8x128xf32>
    %c0_7 = arith.constant 0 : index
    %c0_8 = arith.constant 0 : index
    %23 = vector.load %arg7[%c0_7, %c0_8] : memref<8x128xf32, #tpu.memory_space<vmem>>, vector<8x128xf32>
    %24 = arith.addf %23, %22 : vector<8x128xf32>
    %c0_9 = arith.constant 0 : index
    %c0_10 = arith.constant 0 : index
    %25 = vector.load %arg7[%c0_9, %c0_10] : memref<8x128xf32, #tpu.memory_space<vmem>>, vector<8x128xf32>
    tpu.vector_store %arg7[%c0_9, %c0_10], %24 {strides = array<i32>} : memref<8x128xf32, #tpu.memory_space<vmem>>, vector<8x128xf32>,
    %c0_i32_11 = arith.constant 0 : i32
    %26 = arith.cmpi eq, %arg2, %c0_i32_11 : i32
    %27 = arith.extui %26 : i1 to i32
    %c0_i32_12 = arith.constant 0 : i32
    %28 = arith.cmpi ne, %27, %c0_i32_12 : i32
    scf.if %28 {
      %c0_13 = arith.constant 0 : index
      %c0_14 = arith.constant 0 : index
      %29 = vector.load %arg7[%c0_13, %c0_14] : memref<8x128xf32, #tpu.memory_space<vmem>>, vector<8x128xf32>
      %30 = vector.shape_cast %29 : vector<8x128xf32> to vector<1x8x128xf32>
      %cst_15 = arith.constant dense<0.000000e+00> : vector<1xf32>
      %31 = vector.multi_reduction <add>, %30, %cst_15 [1, 2] : vector<1x8x128xf32> to vector<1xf32>
      %32 = vector.shape_cast %31 : vector<1xf32> to vector<1x1x1xf32>
      %33 = vector.extract %32[0, 0, 0] : f32 from vector<1x1x1xf32>
      %34 = arith.index_cast %arg0 : i32 to index
      %35 = memref.load %arg3[%34] : memref<2xf32, #tpu.memory_space<smem>>
      %cst_16 = arith.constant 0.000000e+00 : f32
      %36 = arith.subf %cst_16, %35 : f32
      %37 = arith.mulf %36, %33 : f32
      %38 = vector.broadcast %37 : f32 to vector<1x1xf32>
      %c0_17 = arith.constant 0 : index
      %c0_18 = arith.constant 0 : index
      %c0_19 = arith.constant 0 : index
      %39 = vector.load %arg6[%c0_17, %c0_18, %c0_19] : memref<1x1x1xf32, #tpu.memory_space<vmem>>, vector<1x1x1xf32>
      %40 = vector.shape_cast %39 : vector<1x1x1xf32> to vector<1x1xf32>
      %41 = vector.shape_cast %38 : vector<1x1xf32> to vector<1x1x1xf32>
      tpu.vector_store %arg6[%c0_17, %c0_18, %c0_19], %41 {strides = array<i32>} : memref<1x1x1xf32, #tpu.memory_space<vmem>>, vector<1x1x1xf32>,
    } else {
    }
    return
  }
  func.func @transform_0(%arg0: i32, %arg1: i32, %arg2: i32, %arg3: memref<2xf32, #tpu.memory_space<smem>>) -> (i32, i32, i32) {
    %c0_i32 = arith.constant 0 : i32
    return %arg0, %arg1, %arg2 : i32, i32, i32
  }
  func.func @transform_1(%arg0: i32, %arg1: i32, %arg2: i32, %arg3: memref<2xf32, #tpu.memory_space<smem>>) -> (i32, i32, i32) {
    %c0_i32 = arith.constant 0 : i32
    %c0_i32_0 = arith.constant 0 : i32
    return %arg0, %arg1, %c0_i32 : i32, i32, i32
  }
  func.func @transform_2(%arg0: i32, %arg1: i32, %arg2: i32, %arg3: memref<2xf32, #tpu.memory_space<smem>>) -> (i32, i32, i32) {
    %c1_i32 = arith.constant 1 : i32
    %0 = arith.muli %arg0, %c1_i32 : i32
    %1 = arith.addi %0, %arg1 : i32
    %c0_i32 = arith.constant 0 : i32
    %c0_i32_0 = arith.constant 0 : i32
    %c0_i32_1 = arith.constant 0 : i32
    return %1, %c0_i32, %c0_i32_0 : i32, i32, i32
  }
}

</mosaic_0001>

<llo_original>
// kernel: tpu_custom_call.1
$region0: #{tpu_custom_call.1}
  #allocation0 [shape = 'u32[]', space=smem, size = 0x4, offset = 0x4, fixed_abs, tag = 'smem constant byte address 0x4 - core index']
  #allocation1 [shape = 'u32[144,128]{1,0:T(1,128)}', space=vmem, size = 0x12000, scoped, tag = 'internal scratch']
  #allocation2 [shape = 'f32[8,128]{1,0:T(8,128)}', space=vmem, size = 0x1000, scoped, tag = 'scratch operand']
  #allocation3 [shape = 's32[1]{0}', space=sflag, size = 0x4, scoped, tag = 'scoped memory for tpu_custom_call.1']
  #allocation4 [shape = 'u8[512]{0}', space=smem, size = 0x200, scoped, tag = 'prefetched SMEM operand 0']
  %s0 = inlined_call_operand.vmem [shape: f32[2], index: 0, kind: input, shape index: {}]
  %s1 = inlined_call_operand.vmem [shape: f32[2,8,128], index: 1, kind: input, shape index: {}]
  %s2 = inlined_call_operand.vmem [shape: s32[2,8,1], index: 2, kind: input, shape index: {}]
  %s3 = inlined_call_operand.vmem [shape: f32[2,1,1], index: 3, kind: output, shape index: {}]
  %s4 = sld [smem:[#allocation0]]
  $region49: #{tpu_custom_call.1} parent=0
    _
  %s6 = ssub.s32 1, %s4
  %s7 = scalar_select 0, %s6, %s4
  %s8 = sshll.u32 %s0, 4
  %s9 = int_to_ptr.vmem [resolvable:$true] %s8
  %11 = dma.vmem_to_smem %s9, 16, [#allocation4], [#allocation3]
  %12 = dma.done [#allocation3], 16
  %13 = sfence
  loop: start=0, step=1, limit=4
  $region2: #{tpu_custom_call.1} parent=0 // loop_pre_header
    _
  $region3: #{tpu_custom_call.1} parent=0 // loop_header
    %s15 = sphi 0, %s19
    %p16 = scmp.ge.s32.totalorder %s15, 4
    %s22 = sphi 0, %s41
    %s23 = sphi 0, %s37
    %s24 = sphi 0, %s33
    %s25 = sphi 0, %s22
    %s26 = sphi 0, %s23
    %s27 = sphi 0, %s24
    %s28 = sphi 0, %s25
    %s29 = sphi 0, %s26
    %s30 = sphi 0, %s27
    %s48 = sphi 0, %s50
    %s51 = sphi 0, %s48
    %s52 = sphi 0, %s51
    %s68 = sphi 0, %s52
    %s76 = sphi 0, %s78
    %s79 = sphi 0, %s76
    %s80 = sphi 0, %s79
    %s96 = sphi 0, %s80
    %s104 = sphi 0, %s106
    %s107 = sphi 0, %s104
    %s108 = sphi 0, %s107
    %s124 = sphi 0, %s108
  $region4: #{tpu_custom_call.1} parent=0 // loop_header_branch
    %18 = sbr.rel (%p16) target = $region8
  $region5: #{tpu_custom_call.1} parent=0 // loop_body
    %s20 = ssub.s32 %s15, 1
    %s21 = ssub.s32 %s15, 2
    %s31 = sadd.s32 1, %s24
    %p32 = scmp.ge.s32.totalorder %s31, 1
    %s33 = scalar_select %p32, 0, %s31
    %s34 = sadd.s32 1, %s23
    %s35 = scalar_select %p32, %s34, %s23
    %p36 = scmp.ge.s32.totalorder %s35, 1
    %s37 = scalar_select %p36, 0, %s35
    %s38 = sadd.s32 1, %s22
    %s39 = scalar_select %p36, %s38, %s22
    %p40 = scmp.ge.s32.totalorder %s39, 2
    %s41 = scalar_select %p40, 0, %s39
    %s42 = ssub.s32 %s22, %s41
    %s43 = ssub.s32 %s23, %s37
    %s44 = sor.u32 %s42, %s43
    %s45 = ssub.s32 %s24, %s33
    %s46 = sor.u32 %s44, %s45
    %p47 = scmp.eq.s32.totalorder %s46, 0
    %s49 = sadd.s32 %s48, 1
    %s50 = scalar_select %p47, %s48, %s49
    %p53 = pneg %p47
    %p54 = scmp.eq.s32.totalorder %s15, 1
    %p55 = por %p53, %p54
    %p56 = scmp.ne.s32.totalorder %s48, %s51
    %p57 = scmp.eq.s32.totalorder %s15, 0
    %p58 = por %p56, %p57
    %p59 = scmp.ne.s32.totalorder %s48, %s51
    %p60 = scmp.eq.s32.totalorder %s20, 1
    %p61 = por %p59, %p60
    %p62 = scmp.ne.s32.totalorder %s51, %s52
    %p63 = scmp.eq.s32.totalorder %s20, 0
    %p64 = por %p62, %p63
    %p65 = scmp.ne.s32.totalorder %s51, %s52
    %p66 = scmp.eq.s32.totalorder %s21, 1
    %p67 = por %p65, %p66
    %p69 = scmp.ne.s32.totalorder %s52, %s68
    %p70 = scmp.eq.s32.totalorder %s21, 0
    %p71 = por %p69, %p70
    %s72 = ssub.s32 %s22, %s41
    %s73 = ssub.s32 %s23, %s37
    %s74 = sor.u32 %s72, %s73
    %p75 = scmp.eq.s32.totalorder %s74, 0
    %s77 = sadd.s32 %s76, 1
    %s78 = scalar_select %p75, %s76, %s77
    %p81 = pneg %p75
    %p82 = scmp.eq.s32.totalorder %s15, 1
    %p83 = por %p81, %p82
    %p84 = scmp.ne.s32.totalorder %s76, %s79
    %p85 = scmp.eq.s32.totalorder %s15, 0
    %p86 = por %p84, %p85
    %p87 = scmp.ne.s32.totalorder %s76, %s79
    %p88 = scmp.eq.s32.totalorder %s20, 1
    %p89 = por %p87, %p88
    %p90 = scmp.ne.s32.totalorder %s79, %s80
    %p91 = scmp.eq.s32.totalorder %s20, 0
    %p92 = por %p90, %p91
    %p93 = scmp.ne.s32.totalorder %s79, %s80
    %p94 = scmp.eq.s32.totalorder %s21, 1
    %p95 = por %p93, %p94
    %p97 = scmp.ne.s32.totalorder %s80, %s96
    %p98 = scmp.eq.s32.totalorder %s21, 0
    %p99 = por %p97, %p98
    %s100 = sadd.s32 %s22, %s23
    %s101 = sadd.s32 %s41, %s37
    %s102 = ssub.s32 %s100, %s101
    %p103 = scmp.eq.s32.totalorder %s102, 0
    %s105 = sadd.s32 %s104, 1
    %s106 = scalar_select %p103, %s104, %s105
    %p109 = pneg %p103
    %p110 = scmp.eq.s32.totalorder %s15, 1
    %p111 = por %p109, %p110
    %p112 = scmp.ne.s32.totalorder %s104, %s107
    %p113 = scmp.eq.s32.totalorder %s15, 0
    %p114 = por %p112, %p113
    %p115 = scmp.ne.s32.totalorder %s104, %s107
    %p116 = scmp.eq.s32.totalorder %s20, 1
    %p117 = por %p115, %p116
    %p118 = scmp.ne.s32.totalorder %s107, %s108
    %p119 = scmp.eq.s32.totalorder %s20, 0
    %p120 = por %p118, %p119
    %p121 = scmp.ne.s32.totalorder %s107, %s108
    %p122 = scmp.eq.s32.totalorder %s21, 1
    %p123 = por %p121, %p122
    %p125 = scmp.ne.s32.totalorder %s108, %s124
    %p126 = scmp.eq.s32.totalorder %s21, 0
    %p127 = por %p125, %p126
    %p128 = scmp.le.s32.totalorder 1, %s15
    %p129 = scmp.lt.s32.totalorder %s15, 3
    %p130 = pnand %p128, %p129
    %p131 = pneg %p130
    // Predicated region
    $region9: #{tpu_custom_call.1} parent=5 // pred_check
      _
    $region10: #{tpu_custom_call.1} parent=5 // pred_check_branch
      %133 = sbr.rel (%p130) target = $region12
    $region11: #{tpu_custom_call.1} parent=5 // pred_region
      %s134 = ssub.s32 %s15, 1
    $region12: #{tpu_custom_call.1} parent=5 // pred_fallthru
      _
    %p135 = scmp.lt.s32.totalorder %s15, 2
    // Predicated region
    $region13: #{tpu_custom_call.1} parent=5 // pred_check
      %p136 = pneg %p135
    $region14: #{tpu_custom_call.1} parent=5 // pred_check_branch
      %138 = sbr.rel (%p136) target = $region16
    $region15: #{tpu_custom_call.1} parent=5 // pred_region
      // Predicated region
      $region17: #{tpu_custom_call.1} parent=15 // pred_check
        %p139 = pneg %p58
      $region18: #{tpu_custom_call.1} parent=15 // pred_check_branch
        %141 = sbr.rel (%p139) target = $region20
      $region19: #{tpu_custom_call.1} parent=15 // pred_region
        %p142 = scmp.lt.s32.totalorder %s22, 1
        %s143 = scalar_select %p142, %s22, 1
        %p144 = scmp.lt.s32.totalorder %s23, 0
        %s145 = scalar_select %p144, %s23, 0
        %p146 = scmp.lt.s32.totalorder %s24, 0
        %s147 = scalar_select %p146, %s24, 0
        %s148 = sadd.s32 %s147, %s145
        %s149 = sadd.s32 %s148, %s143
        %s150 = smul.addr %s149, 8
        %s151 = scalar_lea.vmem %s1, %s150
      $region20: #{tpu_custom_call.1} parent=15 // pred_fallthru
        _
      // Predicated region
      $region21: #{tpu_custom_call.1} parent=15 // pred_check
        %p152 = pneg %p86
      $region22: #{tpu_custom_call.1} parent=15 // pred_check_branch
        %154 = sbr.rel (%p152) target = $region24
      $region23: #{tpu_custom_call.1} parent=15 // pred_region
        %p155 = scmp.lt.s32.totalorder %s22, 1
        %s156 = scalar_select %p155, %s22, 1
        %p157 = scmp.lt.s32.totalorder %s23, 0
        %s158 = scalar_select %p157, %s23, 0
        %s159 = sadd.s32 %s158, %s156
        %s160 = smul.addr %s159, 8
        %s161 = scalar_lea.vmem %s2, %s160
      $region24: #{tpu_custom_call.1} parent=15 // pred_fallthru
        _
    $region16: #{tpu_custom_call.1} parent=5 // pred_fallthru
      _
    %p162 = scmp.le.s32.totalorder 1, %s15
    %p163 = scmp.lt.s32.totalorder %s15, 3
    %p164 = pnand %p162, %p163
    %p165 = pneg %p164
    // Predicated region
    $region25: #{tpu_custom_call.1} parent=5 // pred_check
      _
    $region26: #{tpu_custom_call.1} parent=5 // pred_check_branch
      %167 = sbr.rel (%p164) target = $region28
    $region27: #{tpu_custom_call.1} parent=5 // pred_region
      %s168 = ssub.s32 %s15, 1
      %p169 = scmp.lt.s32.totalorder %s25, 1
      %s170 = scalar_select %p169, %s25, 1
      %p171 = scmp.lt.s32.totalorder %s26, 0
      %s172 = scalar_select %p171, %s26, 0
      %p173 = scmp.lt.s32.totalorder %s27, 0
      %s174 = scalar_select %p173, %s27, 0
      %s175 = sadd.s32 %s174, %s172
      %s176 = sadd.s32 %s175, %s170
      %s177 = smul.addr %s176, 8
      %s178 = scalar_lea.vmem %s1, %s177
      %p179 = pneg %p64
      %p180 = pneg %p61
      %p181 = scmp.lt.s32.totalorder %s25, 1
      %s182 = scalar_select %p181, %s25, 1
      %p183 = scmp.lt.s32.totalorder %s26, 0
      %s184 = scalar_select %p183, %s26, 0
      %s185 = sadd.s32 %s184, %s182
      %s186 = smul.addr %s185, 8
      %s187 = scalar_lea.vmem %s2, %s186
      %p188 = pneg %p92
      %p189 = pneg %p89
      %p190 = pneg %p120
      %p191 = pneg %p117
      %s192 = sadd.s32 %s25, %s26
      %p193 = scmp.lt.s32.totalorder %s192, 1
      %s194 = scalar_select %p193, %s192, 1
      %s195 = scalar_lea.vmem %s3, %s194
      %p196 = scmp.lt.s32.totalorder %s25, 1
      %s197 = scalar_select %p196, %s25, 1
      %p198 = scmp.lt.s32.totalorder %s26, 0
      %s199 = scalar_select %p198, %s26, 0
      %p200 = scmp.lt.s32.totalorder %s27, 0
      %s201 = scalar_select %p200, %s27, 0
      %s202 = sadd.s32 %s201, %s199
      %s203 = sadd.s32 %s202, %s197
      %s204 = smul.addr %s203, 8
      %s205 = scalar_lea.vmem %s1, %s204
      %p206 = scmp.lt.s32.totalorder %s25, 1
      %s207 = scalar_select %p206, %s25, 1
      %p208 = scmp.lt.s32.totalorder %s26, 0
      %s209 = scalar_select %p208, %s26, 0
      %s210 = sadd.s32 %s209, %s207
      %s211 = smul.addr %s210, 8
      %s212 = scalar_lea.vmem %s2, %s211
      %s213 = sadd.s32 %s25, %s26
      %p214 = scmp.lt.s32.totalorder %s213, 1
      %s215 = scalar_select %p214, %s213, 1
      %s216 = scalar_lea.vmem %s3, %s215
      %s217 = sadd.s32 %s25, %s26
      %p218 = scmp.eq.s32.totalorder %s27, 0
      // Predicated region
      $region29: #{tpu_custom_call.1} parent=27 // pred_check
        %p219 = pneg %p218
      $region30: #{tpu_custom_call.1} parent=27 // pred_check_branch
        %221 = sbr.rel (%p219) target = $region32
      $region31: #{tpu_custom_call.1} parent=27 // pred_region
        %222 = vst [vmem:[#allocation2] sm:$0xff] 0.0
      $region32: #{tpu_custom_call.1} parent=27 // pred_fallthru
        _
      %v223 = vld [vmem:[%s205] sm:$0xff]
      %v224 = vld [vmem:[%s212] sm:$0xff]
      %s225 = smul.u32 %s26, 8
      %v226 = vlaneseq
      %v227 = vshrl.u32 %v226, 7
      %v228 = vstv %s225
      %v229 = vadd.s32 %v228, %v227
      %vm230 = vcmp.lt.s32.totalorder %v229, 8
      %v231 = vsel %vm230, %v224, 4294967295
      %s232 = smul.u32 %s27, 128
      %v233 = vstv %s232
      %v234 = vsub.s32 %v231, %v233
      %v235 = vlaneseq
      %v236 = vand.u32 %v235, 127
      %237 = vset.pattern.permute.xlu0 0
      %238 = vperm.xlu0 %237, %v234
      %v239 = vpop.permute.xlu0 %238
      %vm240 = vcmp.eq.s32.totalorder %v236, %v239
      %v241 = vsel %vm240, %v223, 0.0
      %v242 = vld [vmem:[#allocation2] sm:$0xff]
      %v243 = vadd.f32 %v242, %v241
      %244 = vst [vmem:[#allocation2] sm:$0xff] %v243
      // Predicated region
      $region33: #{tpu_custom_call.1} parent=27 // pred_check
        %p245 = pneg %p218
      $region34: #{tpu_custom_call.1} parent=27 // pred_check_branch
        %247 = sbr.rel (%p245) target = $region36
      $region35: #{tpu_custom_call.1} parent=27 // pred_region
        %v248 = vld [vmem:[#allocation2] sm:$0xff]
        %249 = vadd.xlane.f32.xlu0 %v248
        %v250 = vpop.xlane.xlu0 %249
        %v251 = vrot.slane %v250, 4
        %v252 = vadd.f32 %v250, %v251
        %v253 = vrot.slane %v252, 2
        %v254 = vadd.f32 %v252, %v253
        %v255 = vrot.slane %v254, 1
        %v256 = vadd.f32 %v254, %v255
        %s257 = vtos %v256
        %s258 = sld [smem:[#allocation4 + %s25]]
        %s259 = ssub.f32 0.0, %s258
        %s260 = smul.f32 %s259, %s257
        %v261 = vstv %s260
        %vm262 = vcmask 0
        %263 = vst.msk [vmem:[%s216] sm:$0x1] %vm262, %v261
      $region36: #{tpu_custom_call.1} parent=27 // pred_fallthru
        _
      %s264 = sadd.s32 %s25, %s26
      %p265 = scmp.lt.s32.totalorder %s264, 1
      %s266 = scalar_select %p265, %s264, 1
      %s267 = scalar_lea.vmem %s3, %s266
      // Predicated region
      $region37: #{tpu_custom_call.1} parent=27 // pred_check
        %p268 = pneg %p117
      $region38: #{tpu_custom_call.1} parent=27 // pred_check_branch
        %270 = sbr.rel (%p268) target = $region40
      $region39: #{tpu_custom_call.1} parent=27 // pred_region
        %s271 = sadd.s32 %s25, %s26
      $region40: #{tpu_custom_call.1} parent=27 // pred_fallthru
        _
    $region28: #{tpu_custom_call.1} parent=5 // pred_fallthru
      _
    %p272 = scmp.le.s32.totalorder 2, %s15
    // Predicated region
    $region41: #{tpu_custom_call.1} parent=5 // pred_check
      %p273 = pneg %p272
    $region42: #{tpu_custom_call.1} parent=5 // pred_check_branch
      %275 = sbr.rel (%p273) target = $region44
    $region43: #{tpu_custom_call.1} parent=5 // pred_region
      %s276 = ssub.s32 %s15, 2
      // Predicated region
      $region45: #{tpu_custom_call.1} parent=43 // pred_check
        %p277 = pneg %p123
      $region46: #{tpu_custom_call.1} parent=43 // pred_check_branch
        %279 = sbr.rel (%p277) target = $region48
      $region47: #{tpu_custom_call.1} parent=43 // pred_region
        %s280 = sadd.s32 %s28, %s29
        %p281 = scmp.lt.s32.totalorder %s280, 1
        %s282 = scalar_select %p281, %s280, 1
        %s283 = scalar_lea.vmem %s3, %s282
      $region48: #{tpu_custom_call.1} parent=43 // pred_fallthru
        _
    $region44: #{tpu_custom_call.1} parent=5 // pred_fallthru
      _
  $region6: #{tpu_custom_call.1} parent=0 // loop_footer
    %s19 = sadd.s32 1, %s15
  $region7: #{tpu_custom_call.1} parent=0 // loop_footer_branch
    %14 = sbr.rel target = $region3
  $region8: #{tpu_custom_call.1} parent=0 // loop_exit
    _

</llo_original>
